<compile_context>
chip_gen: v7x
topology: tpu7x:2x2x1
jax: 0.10.0
libtpu: 0.0.40
codegen_flags: <defaults>
</compile_context>

<pallas_src>
import functools

import jax
import jax.numpy as jnp
import numpy as np
from jax import lax
from jax.experimental import pallas as pl
from jax.experimental.pallas import tpu as pltpu

LANES = 128


def _bce_dice_partials_kernel(idx_ref, x_ref, lab_ref,
                              inter_ref, sump_ref, sumt_ref, bce_ref,
                              *, valid_elems, needs_mask):
    # grid = (outer index c, batch n, row-tile r); only r is a reduction axis.
    r = pl.program_id(2)

    @pl.when(r == 0)
    def _():
        inter_ref[...] = jnp.zeros_like(inter_ref)
        sump_ref[...] = jnp.zeros_like(sump_ref)
        sumt_ref[...] = jnp.zeros_like(sumt_ref)
        bce_ref[...] = jnp.zeros_like(bce_ref)

    x = x_ref[...].astype(jnp.float32)          # (K, rt, 128) logits
    lab = lab_ref[...]                          # (rt, 128) int32 class labels
    kq, rt, ln = x.shape

    if needs_mask:
        # Validity mask over the flattened (padded / boundary-clipped) spatial axis.
        row = lax.broadcasted_iota(jnp.int32, (rt, ln), 0)
        lane = lax.broadcasted_iota(jnp.int32, (rt, ln), 1)
        flat = (r * rt + row) * ln + lane
        valid = flat < valid_elems              # (rt, 128) bool
        x = jnp.where(valid[None], x, 0.0)      # neutralize pad/garbage before exp
    else:
        valid = None

    # ---- softmax over the class axis K (axis 0 → cheap cross-vreg VALU max/add) ----
    m = jnp.max(x, axis=0, keepdims=True)
    e = jnp.exp(x - m)
    denom = jnp.sum(e, axis=0, keepdims=True)
    inv = pl.reciprocal(denom, approx=True)     # EUP approx ...
    inv = inv * (2.0 - denom * inv)             # ... + one Newton step (2 VALU ops)
    p = e * inv                                 # (K, rt, 128)

    # ---- hard one-hot as a bool mask (no f32 cast, where-selects, no multiplies) ----
    onehot = lax.broadcasted_iota(jnp.int32, x.shape, 0) == lab[None]   # (K, rt, 128)
    sel = jnp.logical_and(onehot, valid[None]) if needs_mask else onehot

    # ---- per-class partial sums (reduce rows here; lanes + n reduced on host) ----
    inter_ref[...] += jnp.sum(jnp.where(sel, p, 0.0), axis=1)           # (K, 128)
    sumt_ref[...] += jnp.sum(jnp.where(sel, 1.0, 0.0), axis=1)          # (K, 128)
    p_for_sum = jnp.where(valid[None], p, 0.0) if needs_mask else p
    sump_ref[...] += jnp.sum(p_for_sum, axis=1)                         # (K, 128)

    # ---- BCEWithLogits, numerically stable: max(x,0) - x*t + log1p(exp(-|x|)) ----
    bce = jnp.maximum(x, 0.0) - jnp.where(onehot, x, 0.0) + jnp.log1p(jnp.exp(-jnp.abs(x)))
    bce_rows = jnp.sum(bce, axis=0)                                     # (rt, 128)
    if needs_mask:
        bce_rows = jnp.where(valid, bce_rows, 0.0)
    bce_ref[...] += jnp.sum(bce_rows, axis=0, keepdims=True)            # (1, 128)


def _round_up(v, m):
    return ((v + m - 1) // m) * m


def custom_bce_dice_loss(x, labels, num_classes, alpha=0.7, beta=0.3,
                         smooth=1e-5, eps=1e-7, *,
                         target_block_bytes=3 << 20, row_tile=None,
                         stream_bf16=False):
    """x: (num_outer, N, K, H, W) float logits.
    labels: (num_outer, N, H, W) integer hard class labels (one-hot rebuilt in-kernel).
    num_classes: iterable of outer indices the module loops over."""
    x = jnp.asarray(x)
    x = x.astype(jnp.bfloat16) if stream_bf16 else x.astype(jnp.float32)
    labels = jnp.asarray(labels, dtype=jnp.int32)
    c_total, n, k, h, w = x.shape
    hw = h * w

    # ---- lane-pack the spatial axis; pad to a multiple of 8*128 only when needed ----
    hw_pad = hw if hw % LANES == 0 else _round_up(hw, 8 * LANES)
    rows = hw_pad // LANES

    x_flat = x.reshape(c_total, n, k, hw)
    lab_flat = labels.reshape(c_total, n, hw)
    if hw_pad != hw:
        pad = hw_pad - hw
        x_flat = jnp.pad(x_flat, ((0, 0), (0, 0), (0, 0), (0, pad)))
        lab_flat = jnp.pad(lab_flat, ((0, 0), (0, 0), (0, pad)))
    x5 = x_flat.reshape(c_total, n, k, rows, LANES)
    lab4 = lab_flat.reshape(c_total, n, rows, LANES)

    # ---- K-aware row tile: x block ≈ target_block_bytes (multiple of 32 rows) ----
    elem = 2 if stream_bf16 else 4
    if row_tile is not None:
        rt = min(int(row_tile), rows)
    else:
        rt_target = max(32, (int(target_block_bytes) // (k * LANES * elem)) // 32 * 32)
        rt = rows if rows <= rt_target else rt_target
    num_r = -(-rows // rt)
    needs_mask = (hw_pad != hw) or (rows % rt != 0)

    idx = jnp.asarray([int(i) for i in num_classes], dtype=jnp.int32)
    c = int(idx.shape[0])

    kernel = functools.partial(_bce_dice_partials_kernel,
                               valid_elems=hw, needs_mask=needs_mask)

    # ---- VMEM budget from actual double-buffered block sizes (capped) ----
    x_blk = k * rt * LANES * elem
    lab_blk = rt * LANES * 4
    out_blk = (3 * k + 1) * LANES * 4
    usage = 2 * (x_blk + lab_blk + out_blk)
    vmem_limit = int(min(48 << 20, max(16 << 20, int(1.5 * usage) + (4 << 20))))

    out_map = lambda i, nn, r, idx_ref: (i, nn, 0, 0)
    out_spec_k = pl.BlockSpec((pl.Squeezed(), pl.Squeezed(), k, LANES), out_map)
    out_spec_1 = pl.BlockSpec((pl.Squeezed(), pl.Squeezed(), 1, LANES), out_map)

    inter, sump, sumt, bce_sum = pl.pallas_call(
        kernel,
        out_shape=(
            jax.ShapeDtypeStruct((c, n, k, LANES), jnp.float32),
            jax.ShapeDtypeStruct((c, n, k, LANES), jnp.float32),
            jax.ShapeDtypeStruct((c, n, k, LANES), jnp.float32),
            jax.ShapeDtypeStruct((c, n, 1, LANES), jnp.float32),
        ),
        grid_spec=pltpu.PrefetchScalarGridSpec(
            num_scalar_prefetch=1,          # idx array → SMEM, indexed in index_maps
            grid=(c, n, num_r),
            in_specs=[
                pl.BlockSpec((pl.Squeezed(), pl.Squeezed(), k, rt, LANES),
                             lambda i, nn, r, idx_ref: (idx_ref[i], nn, 0, r, 0)),
                pl.BlockSpec((pl.Squeezed(), pl.Squeezed(), rt, LANES),
                             lambda i, nn, r, idx_ref: (idx_ref[i], nn, r, 0)),
            ],
            out_specs=[out_spec_k, out_spec_k, out_spec_k, out_spec_1],
        ),
        compiler_params=pltpu.CompilerParams(
            # c and n are both independent (per-(c,n) partials) → 2-TC sharding on v7x;
            # only the row-tile axis carries the accumulation dependency.
            dimension_semantics=("parallel", "parallel", "arbitrary"),
            vmem_limit_bytes=vmem_limit,
        ),
    )(idx, x5, lab4)

    # ---- tiny finalize in JAX (Dice per outer index + BCE mean, then summed) ----
    inter_c = jnp.sum(inter, axis=(1, 3))        # (c, K)
    sump_c = jnp.sum(sump, axis=(1, 3))
    sumt_c = jnp.sum(sumt, axis=(1, 3))
    bce_c = jnp.sum(bce_sum, axis=(1, 2, 3))     # (c,)
    card = sump_c + sumt_c
    score = (2.0 * inter_c + smooth) / jnp.maximum(card + smooth, eps)
    present = (sumt_c > 0).astype(jnp.float32)   # smp: skip channels absent from target
    dice_loss = jnp.mean((1.0 - score) * present, axis=1)          # (c,)
    bce_mean = bce_c / float(n * k * h * w)                        # (c,)
    return jnp.sum(beta * dice_loss + alpha * bce_mean)


def _reference(x, labels, num_classes, alpha=0.7, beta=0.3, smooth=1e-5, eps=1e-7):
    """Pure-JAX reference mirroring the PyTorch forward (hard one-hot targets)."""
    total = 0.0
    for i in num_classes:
        xi = x[i].astype(jnp.float32)                          # (N, K, H, W)
        n_, k_, h_, w_ = xi.shape
        ti = jax.nn.one_hot(labels[i], k_, dtype=jnp.float32)  # (N, H, W, K)
        ti = jnp.transpose(ti, (0, 3, 1, 2))                   # (N, K, H, W)
        p = jax.nn.softmax(xi, axis=1).transpose(1, 0, 2, 3).reshape(k_, -1)
        t = ti.transpose(1, 0, 2, 3).reshape(k_, -1)
        inter = jnp.sum(p * t, axis=1)
        card = jnp.sum(p + t, axis=1)
        score = (2.0 * inter + smooth) / jnp.maximum(card + smooth, eps)
        loss_k = (1.0 - score) * (jnp.sum(t, axis=1) > 0).astype(jnp.float32)
        dice = jnp.mean(loss_k)
        bce = jnp.mean(jnp.maximum(xi, 0.0) - xi * ti + jnp.log1p(jnp.exp(-jnp.abs(xi))))
        total = total + beta * dice + alpha * bce
    return total


if __name__ == "__main__":
    base_key = jax.random.PRNGKey(0)

    def run_case(tag, c_total, n, k, h, w, num_classes, **kw):
        kx, ky = jax.random.split(jax.random.fold_in(base_key, hash(tag) % (1 << 16)))
        x = jax.random.normal(kx, (c_total, n, k, h, w), dtype=jnp.float32)
        labels = jax.random.randint(ky, (c_total, n, h, w), 0, k, dtype=jnp.int32)
        out = jax.block_until_ready(custom_bce_dice_loss(x, labels, num_classes, **kw))
        ref = jax.block_until_ready(_reference(x, labels, num_classes))
        np.testing.assert_allclose(np.asarray(out), np.asarray(ref),
                                   rtol=1e-5, atol=5e-5)

    # Main small case implied by the module (batch=2, classes=4, spatial=16).
    run_case("base", 2, 2, 4, 16, 16, (0, 1))
    # H*W % 128 != 0 → host pad to 8*128 + in-kernel validity mask path.
    run_case("pad", 2, 2, 3, 15, 15, (0, 1))
    # Outer-index subset via scalar prefetch + multi row-tile accumulation.
    run_case("tiles", 3, 2, 4, 64, 64, (0, 2), row_tile=8)

    print("KERNEL_OK")
</pallas_src>

<mosaic_0001>
module attributes {stable_mosaic.version = 11 : i64} {
  func.func @_bce_dice_partials_kernel(%arg0: i32, %arg1: i32, %arg2: i32, %arg3: memref<2xi32, #tpu.memory_space<smem>>, %arg4: memref<1x1x4x2x128xf32, #tpu.memory_space<vmem>>, %arg5: memref<1x1x2x128xi32, #tpu.memory_space<vmem>>, %arg6: memref<1x1x4x128xf32, #tpu.memory_space<vmem>>, %arg7: memref<1x1x4x128xf32, #tpu.memory_space<vmem>>, %arg8: memref<1x1x4x128xf32, #tpu.memory_space<vmem>>, %arg9: memref<1x1x1x128xf32, #tpu.memory_space<vmem>>) attributes {dimension_semantics = [#tpu.dimension_semantics<parallel>, #tpu.dimension_semantics<parallel>, #tpu.dimension_semantics<arbitrary>], iteration_bounds = array<i64: 2, 2, 1>, scalar_prefetch = 1 : i64, scratch_operands = 0 : i64, tpu.core_type = #tpu.core_type<tc>, window_params = [{transform_indices = @transform_0, window_bounds = array<i64: 1, 1, 4, 2, 128>}, {transform_indices = @transform_1, window_bounds = array<i64: 1, 1, 2, 128>}, {transform_indices = @transform_2, window_bounds = array<i64: 1, 1, 4, 128>}, {transform_indices = @transform_3, window_bounds = array<i64: 1, 1, 4, 128>}, {transform_indices = @transform_4, window_bounds = array<i64: 1, 1, 4, 128>}, {transform_indices = @transform_5, window_bounds = array<i64: 1, 1, 1, 128>}]} {
    %c0_i32 = arith.constant 0 : i32
    %0 = arith.cmpi eq, %arg2, %c0_i32 : i32
    %1 = arith.extui %0 : i1 to i32
    %c0_i32_0 = arith.constant 0 : i32
    %2 = arith.cmpi ne, %1, %c0_i32_0 : i32
    scf.if %2 {
      %cst_54 = arith.constant 0.000000e+00 : f32
      %71 = vector.broadcast %cst_54 : f32 to vector<4x128xf32>
      %c0_55 = arith.constant 0 : index
      %c0_56 = arith.constant 0 : index
      %c0_57 = arith.constant 0 : index
      %c0_58 = arith.constant 0 : index
      %72 = vector.load %arg6[%c0_55, %c0_56, %c0_57, %c0_58] : memref<1x1x4x128xf32, #tpu.memory_space<vmem>>, vector<1x1x4x128xf32>
      %73 = vector.shape_cast %72 : vector<1x1x4x128xf32> to vector<4x128xf32>
      %74 = vector.shape_cast %71 : vector<4x128xf32> to vector<1x1x4x128xf32>
      tpu.vector_store %arg6[%c0_55, %c0_56, %c0_57, %c0_58], %74 {strides = array<i32>} : memref<1x1x4x128xf32, #tpu.memory_space<vmem>>, vector<1x1x4x128xf32>,
      %cst_59 = arith.constant 0.000000e+00 : f32
      %75 = vector.broadcast %cst_59 : f32 to vector<4x128xf32>
      %c0_60 = arith.constant 0 : index
      %c0_61 = arith.constant 0 : index
      %c0_62 = arith.constant 0 : index
      %c0_63 = arith.constant 0 : index
      %76 = vector.load %arg7[%c0_60, %c0_61, %c0_62, %c0_63] : memref<1x1x4x128xf32, #tpu.memory_space<vmem>>, vector<1x1x4x128xf32>
      %77 = vector.shape_cast %76 : vector<1x1x4x128xf32> to vector<4x128xf32>
      %78 = vector.shape_cast %75 : vector<4x128xf32> to vector<1x1x4x128xf32>
      tpu.vector_store %arg7[%c0_60, %c0_61, %c0_62, %c0_63], %78 {strides = array<i32>} : memref<1x1x4x128xf32, #tpu.memory_space<vmem>>, vector<1x1x4x128xf32>,
      %cst_64 = arith.constant 0.000000e+00 : f32
      %79 = vector.broadcast %cst_64 : f32 to vector<4x128xf32>
      %c0_65 = arith.constant 0 : index
      %c0_66 = arith.constant 0 : index
      %c0_67 = arith.constant 0 : index
      %c0_68 = arith.constant 0 : index
      %80 = vector.load %arg8[%c0_65, %c0_66, %c0_67, %c0_68] : memref<1x1x4x128xf32, #tpu.memory_space<vmem>>, vector<1x1x4x128xf32>
      %81 = vector.shape_cast %80 : vector<1x1x4x128xf32> to vector<4x128xf32>
      %82 = vector.shape_cast %79 : vector<4x128xf32> to vector<1x1x4x128xf32>
      tpu.vector_store %arg8[%c0_65, %c0_66, %c0_67, %c0_68], %82 {strides = array<i32>} : memref<1x1x4x128xf32, #tpu.memory_space<vmem>>, vector<1x1x4x128xf32>,
      %cst_69 = arith.constant 0.000000e+00 : f32
      %83 = vector.broadcast %cst_69 : f32 to vector<1x128xf32>
      %c0_70 = arith.constant 0 : index
      %c0_71 = arith.constant 0 : index
      %c0_72 = arith.constant 0 : index
      %c0_73 = arith.constant 0 : index
      %84 = vector.load %arg9[%c0_70, %c0_71, %c0_72, %c0_73] : memref<1x1x1x128xf32, #tpu.memory_space<vmem>>, vector<1x1x1x128xf32>
      %85 = vector.shape_cast %84 : vector<1x1x1x128xf32> to vector<1x128xf32>
      %86 = vector.shape_cast %83 : vector<1x128xf32> to vector<1x1x1x128xf32>
      tpu.vector_store %arg9[%c0_70, %c0_71, %c0_72, %c0_73], %86 {strides = array<i32>} : memref<1x1x1x128xf32, #tpu.memory_space<vmem>>, vector<1x1x1x128xf32>,
    } else {
    }
    %c0 = arith.constant 0 : index
    %c0_1 = arith.constant 0 : index
    %c0_2 = arith.constant 0 : index
    %c0_3 = arith.constant 0 : index
    %c0_4 = arith.constant 0 : index
    %3 = vector.load %arg4[%c0, %c0_1, %c0_2, %c0_3, %c0_4] : memref<1x1x4x2x128xf32, #tpu.memory_space<vmem>>, vector<1x1x4x2x128xf32>
    %4 = vector.shape_cast %3 : vector<1x1x4x2x128xf32> to vector<4x2x128xf32>
    %c0_5 = arith.constant 0 : index
    %c0_6 = arith.constant 0 : index
    %c0_7 = arith.constant 0 : index
    %c0_8 = arith.constant 0 : index
    %5 = vector.load %arg5[%c0_5, %c0_6, %c0_7, %c0_8] : memref<1x1x2x128xi32, #tpu.memory_space<vmem>>, vector<1x1x2x128xi32>
    %6 = vector.shape_cast %5 : vector<1x1x2x128xi32> to vector<2x128xi32>
    %cst = arith.constant dense<0xFF800000> : vector<2x128xf32>
    %7 = vector.multi_reduction <maximumf>, %4, %cst [0] : vector<4x2x128xf32> to vector<2x128xf32>
    %8 = vector.shape_cast %7 : vector<2x128xf32> to vector<1x2x128xf32>
    %9 = vector.broadcast %8 : vector<1x2x128xf32> to vector<4x2x128xf32>
    %10 = arith.subf %4, %9 : vector<4x2x128xf32>
    %11 = math.exp %10 : vector<4x2x128xf32>
    %cst_9 = arith.constant dense<0.000000e+00> : vector<2x128xf32>
    %12 = vector.multi_reduction <add>, %11, %cst_9 [0] : vector<4x2x128xf32> to vector<2x128xf32>
    %13 = vector.shape_cast %12 : vector<2x128xf32> to vector<1x2x128xf32>
    %14 = tpu.reciprocal %13 {approx = true} : vector<1x2x128xf32> -> vector<1x2x128xf32>
    %15 = arith.mulf %13, %14 : vector<1x2x128xf32>
    %cst_10 = arith.constant 2.000000e+00 : f32
    %16 = vector.broadcast %cst_10 : f32 to vector<1x2x128xf32>
    %17 = arith.subf %16, %15 : vector<1x2x128xf32>
    %18 = arith.mulf %14, %17 : vector<1x2x128xf32>
    %19 = vector.broadcast %18 : vector<1x2x128xf32> to vector<4x2x128xf32>
    %20 = arith.mulf %11, %19 : vector<4x2x128xf32>
    %21 = tpu.iota {dimensions = array<i32: 0>} : vector<4x2x128xi32>
    %22 = vector.shape_cast %6 : vector<2x128xi32> to vector<1x2x128xi32>
    %23 = vector.broadcast %22 : vector<1x2x128xi32> to vector<4x2x128xi32>
    %24 = arith.cmpi eq, %21, %23 : vector<4x2x128xi32>
    %c0_11 = arith.constant 0 : index
    %c0_12 = arith.constant 0 : index
    %c0_13 = arith.constant 0 : index
    %c0_14 = arith.constant 0 : index
    %25 = vector.load %arg6[%c0_11, %c0_12, %c0_13, %c0_14] : memref<1x1x4x128xf32, #tpu.memory_space<vmem>>, vector<1x1x4x128xf32>
    %26 = vector.shape_cast %25 : vector<1x1x4x128xf32> to vector<4x128xf32>
    %cst_15 = arith.constant 0.000000e+00 : f32
    %27 = vector.broadcast %cst_15 : f32 to vector<4x2x128xf32>
    %28 = arith.select %24, %20, %27 : vector<4x2x128xi1>, vector<4x2x128xf32>
    %cst_16 = arith.constant dense<0.000000e+00> : vector<4x128xf32>
    %29 = vector.multi_reduction <add>, %28, %cst_16 [1] : vector<4x2x128xf32> to vector<4x128xf32>
    %30 = arith.addf %26, %29 : vector<4x128xf32>
    %c0_17 = arith.constant 0 : index
    %c0_18 = arith.constant 0 : index
    %c0_19 = arith.constant 0 : index
    %c0_20 = arith.constant 0 : index
    %31 = vector.load %arg6[%c0_17, %c0_18, %c0_19, %c0_20] : memref<1x1x4x128xf32, #tpu.memory_space<vmem>>, vector<1x1x4x128xf32>
    %32 = vector.shape_cast %31 : vector<1x1x4x128xf32> to vector<4x128xf32>
    %33 = vector.shape_cast %30 : vector<4x128xf32> to vector<1x1x4x128xf32>
    tpu.vector_store %arg6[%c0_17, %c0_18, %c0_19, %c0_20], %33 {strides = array<i32>} : memref<1x1x4x128xf32, #tpu.memory_space<vmem>>, vector<1x1x4x128xf32>,
    %c0_21 = arith.constant 0 : index
    %c0_22 = arith.constant 0 : index
    %c0_23 = arith.constant 0 : index
    %c0_24 = arith.constant 0 : index
    %34 = vector.load %arg8[%c0_21, %c0_22, %c0_23, %c0_24] : memref<1x1x4x128xf32, #tpu.memory_space<vmem>>, vector<1x1x4x128xf32>
    %35 = vector.shape_cast %34 : vector<1x1x4x128xf32> to vector<4x128xf32>
    %cst_25 = arith.constant 1.000000e+00 : f32
    %cst_26 = arith.constant 0.000000e+00 : f32
    %36 = vector.broadcast %cst_25 : f32 to vector<4x2x128xf32>
    %37 = vector.broadcast %cst_26 : f32 to vector<4x2x128xf32>
    %38 = arith.select %24, %36, %37 : vector<4x2x128xi1>, vector<4x2x128xf32>
    %cst_27 = arith.constant dense<0.000000e+00> : vector<4x128xf32>
    %39 = vector.multi_reduction <add>, %38, %cst_27 [1] : vector<4x2x128xf32> to vector<4x128xf32>
    %40 = arith.addf %35, %39 : vector<4x128xf32>
    %c0_28 = arith.constant 0 : index
    %c0_29 = arith.constant 0 : index
    %c0_30 = arith.constant 0 : index
    %c0_31 = arith.constant 0 : index
    %41 = vector.load %arg8[%c0_28, %c0_29, %c0_30, %c0_31] : memref<1x1x4x128xf32, #tpu.memory_space<vmem>>, vector<1x1x4x128xf32>
    %42 = vector.shape_cast %41 : vector<1x1x4x128xf32> to vector<4x128xf32>
    %43 = vector.shape_cast %40 : vector<4x128xf32> to vector<1x1x4x128xf32>
    tpu.vector_store %arg8[%c0_28, %c0_29, %c0_30, %c0_31], %43 {strides = array<i32>} : memref<1x1x4x128xf32, #tpu.memory_space<vmem>>, vector<1x1x4x128xf32>,
    %c0_32 = arith.constant 0 : index
    %c0_33 = arith.constant 0 : index
    %c0_34 = arith.constant 0 : index
    %c0_35 = arith.constant 0 : index
    %44 = vector.load %arg7[%c0_32, %c0_33, %c0_34, %c0_35] : memref<1x1x4x128xf32, #tpu.memory_space<vmem>>, vector<1x1x4x128xf32>
    %45 = vector.shape_cast %44 : vector<1x1x4x128xf32> to vector<4x128xf32>
    %cst_36 = arith.constant dense<0.000000e+00> : vector<4x128xf32>
    %46 = vector.multi_reduction <add>, %20, %cst_36 [1] : vector<4x2x128xf32> to vector<4x128xf32>
    %47 = arith.addf %45, %46 : vector<4x128xf32>
    %c0_37 = arith.constant 0 : index
    %c0_38 = arith.constant 0 : index
    %c0_39 = arith.constant 0 : index
    %c0_40 = arith.constant 0 : index
    %48 = vector.load %arg7[%c0_37, %c0_38, %c0_39, %c0_40] : memref<1x1x4x128xf32, #tpu.memory_space<vmem>>, vector<1x1x4x128xf32>
    %49 = vector.shape_cast %48 : vector<1x1x4x128xf32> to vector<4x128xf32>
    %50 = vector.shape_cast %47 : vector<4x128xf32> to vector<1x1x4x128xf32>
    tpu.vector_store %arg7[%c0_37, %c0_38, %c0_39, %c0_40], %50 {strides = array<i32>} : memref<1x1x4x128xf32, #tpu.memory_space<vmem>>, vector<1x1x4x128xf32>,
    %cst_41 = arith.constant 0.000000e+00 : f32
    %51 = vector.broadcast %cst_41 : f32 to vector<4x2x128xf32>
    %52 = arith.maximumf %4, %51 : vector<4x2x128xf32>
    %cst_42 = arith.constant 0.000000e+00 : f32
    %53 = vector.broadcast %cst_42 : f32 to vector<4x2x128xf32>
    %54 = arith.select %24, %4, %53 : vector<4x2x128xi1>, vector<4x2x128xf32>
    %55 = arith.subf %52, %54 : vector<4x2x128xf32>
    %56 = math.absf %4 : vector<4x2x128xf32>
    %cst_43 = arith.constant 0.000000e+00 : f32
    %57 = vector.broadcast %cst_43 : f32 to vector<4x2x128xf32>
    %58 = arith.subf %57, %56 : vector<4x2x128xf32>
    %59 = math.exp %58 : vector<4x2x128xf32>
    %60 = math.log1p %59 : vector<4x2x128xf32>
    %61 = arith.addf %55, %60 : vector<4x2x128xf32>
    %cst_44 = arith.constant dense<0.000000e+00> : vector<2x128xf32>
    %62 = vector.multi_reduction <add>, %61, %cst_44 [0] : vector<4x2x128xf32> to vector<2x128xf32>
    %c0_45 = arith.constant 0 : index
    %c0_46 = arith.constant 0 : index
    %c0_47 = arith.constant 0 : index
    %c0_48 = arith.constant 0 : index
    %63 = vector.load %arg9[%c0_45, %c0_46, %c0_47, %c0_48] : memref<1x1x1x128xf32, #tpu.memory_space<vmem>>, vector<1x1x1x128xf32>
    %64 = vector.shape_cast %63 : vector<1x1x1x128xf32> to vector<1x128xf32>
    %cst_49 = arith.constant dense<0.000000e+00> : vector<128xf32>
    %65 = vector.multi_reduction <add>, %62, %cst_49 [0] : vector<2x128xf32> to vector<128xf32>
    %66 = vector.shape_cast %65 : vector<128xf32> to vector<1x128xf32>
    %67 = arith.addf %64, %66 : vector<1x128xf32>
    %c0_50 = arith.constant 0 : index
    %c0_51 = arith.constant 0 : index
    %c0_52 = arith.constant 0 : index
    %c0_53 = arith.constant 0 : index
    %68 = vector.load %arg9[%c0_50, %c0_51, %c0_52, %c0_53] : memref<1x1x1x128xf32, #tpu.memory_space<vmem>>, vector<1x1x1x128xf32>
    %69 = vector.shape_cast %68 : vector<1x1x1x128xf32> to vector<1x128xf32>
    %70 = vector.shape_cast %67 : vector<1x128xf32> to vector<1x1x1x128xf32>
    tpu.vector_store %arg9[%c0_50, %c0_51, %c0_52, %c0_53], %70 {strides = array<i32>} : memref<1x1x1x128xf32, #tpu.memory_space<vmem>>, vector<1x1x1x128xf32>,
    return
  }
  func.func @transform_0(%arg0: i32, %arg1: i32, %arg2: i32, %arg3: memref<2xi32, #tpu.memory_space<smem>>) -> (i32, i32, i32, i32, i32) {
    %0 = arith.index_cast %arg0 : i32 to index
    %1 = memref.load %arg3[%0] : memref<2xi32, #tpu.memory_space<smem>>
    %c0_i32 = arith.constant 0 : i32
    %c0_i32_0 = arith.constant 0 : i32
    %c0_i32_1 = arith.constant 0 : i32
    return %1, %arg1, %c0_i32, %arg2, %c0_i32_0 : i32, i32, i32, i32, i32
  }
  func.func @transform_1(%arg0: i32, %arg1: i32, %arg2: i32, %arg3: memref<2xi32, #tpu.memory_space<smem>>) -> (i32, i32, i32, i32) {
    %0 = arith.index_cast %arg0 : i32 to index
    %1 = memref.load %arg3[%0] : memref<2xi32, #tpu.memory_space<smem>>
    %c0_i32 = arith.constant 0 : i32
    %c0_i32_0 = arith.constant 0 : i32
    return %1, %arg1, %arg2, %c0_i32 : i32, i32, i32, i32
  }
  func.func @transform_2(%arg0: i32, %arg1: i32, %arg2: i32, %arg3: memref<2xi32, #tpu.memory_space<smem>>) -> (i32, i32, i32, i32) {
    %c0_i32 = arith.constant 0 : i32
    %c0_i32_0 = arith.constant 0 : i32
    %c0_i32_1 = arith.constant 0 : i32
    return %arg0, %arg1, %c0_i32, %c0_i32_0 : i32, i32, i32, i32
  }
  func.func @transform_3(%arg0: i32, %arg1: i32, %arg2: i32, %arg3: memref<2xi32, #tpu.memory_space<smem>>) -> (i32, i32, i32, i32) {
    %c0_i32 = arith.constant 0 : i32
    %c0_i32_0 = arith.constant 0 : i32
    %c0_i32_1 = arith.constant 0 : i32
    return %arg0, %arg1, %c0_i32, %c0_i32_0 : i32, i32, i32, i32
  }
  func.func @transform_4(%arg0: i32, %arg1: i32, %arg2: i32, %arg3: memref<2xi32, #tpu.memory_space<smem>>) -> (i32, i32, i32, i32) {
    %c0_i32 = arith.constant 0 : i32
    %c0_i32_0 = arith.constant 0 : i32
    %c0_i32_1 = arith.constant 0 : i32
    return %arg0, %arg1, %c0_i32, %c0_i32_0 : i32, i32, i32, i32
  }
  func.func @transform_5(%arg0: i32, %arg1: i32, %arg2: i32, %arg3: memref<2xi32, #tpu.memory_space<smem>>) -> (i32, i32, i32, i32) {
    %c0_i32 = arith.constant 0 : i32
    %c0_i32_0 = arith.constant 0 : i32
    %c0_i32_1 = arith.constant 0 : i32
    return %arg0, %arg1, %c0_i32, %c0_i32_0 : i32, i32, i32, i32
  }
}

</mosaic_0001>

<llo_original>
// kernel: tpu_custom_call.1
$region0: #{tpu_custom_call.1}
  #allocation0 [shape = 'u32[]', space=smem, size = 0x4, offset = 0x4, fixed_abs, tag = 'smem constant byte address 0x4 - core index']
  #allocation1 [shape = 'u32[144,128]{1,0:T(1,128)}', space=vmem, size = 0x12000, scoped, tag = 'internal scratch']
  #allocation2 [shape = 's32[1]{0}', space=sflag, size = 0x4, scoped, tag = 'scoped memory for tpu_custom_call.1']
  #allocation3 [shape = 'u8[512]{0}', space=smem, size = 0x200, scoped, tag = 'prefetched SMEM operand 0']
  %s0 = inlined_call_operand.hbm [shape: s32[2], index: 0, kind: input, shape index: {}]
  %s1 = inlined_call_operand.hbm [shape: f32[2,2,4,2,128], index: 1, kind: input, shape index: {}]
  %s2 = inlined_call_operand.hbm [shape: s32[2,2,2,128], index: 2, kind: input, shape index: {}]
  %s3 = inlined_call_operand.hbm [shape: f32[2,2,4,128], index: 3, kind: output, shape index: {0}]
  %s4 = inlined_call_operand.hbm [shape: f32[2,2,4,128], index: 4, kind: output, shape index: {1}]
  %s5 = inlined_call_operand.hbm [shape: f32[2,2,4,128], index: 5, kind: output, shape index: {2}]
  %s6 = inlined_call_operand.hbm [shape: f32[2,2,1,128], index: 6, kind: output, shape index: {3}]
  %7 = xla_tuple %s3, %s4, %s5, %s6
  %s8 = sld [smem:[#allocation0]]
  $region77: #{tpu_custom_call.1} parent=0
    _
  %s10 = ssub.s32 1, %s8
  %s11 = scalar_select 0, %s10, %s8
  %13 = dma.hbm_to_smem %s0, 16, [#allocation3], [#allocation2]
  %14 = dma.done [#allocation2], 16
  %15 = sfence
  $region1: #{tpu_custom_call.1} parent=0
    #allocation4 [shape = 'u8[8192]{0}', space=vmem, size = 0x2000, scoped, tag = 'input window, operand 1']
    #allocation5 [shape = 's32[2]{0}', space=sflag, size = 0x8, scoped, tag = 'scoped memory for tpu_custom_call.1']
    #allocation6 [shape = 's32[2]{0}', space=sflag, size = 0x8, scoped, tag = 'scoped memory for tpu_custom_call.1']
    #allocation7 [shape = 'u8[2048]{0}', space=vmem, size = 0x800, scoped, tag = 'input window, operand 2']
    #allocation8 [shape = 's32[2]{0}', space=sflag, size = 0x8, scoped, tag = 'scoped memory for tpu_custom_call.1']
    #allocation9 [shape = 'u8[4096]{0}', space=vmem, size = 0x1000, scoped, tag = 'output window, operand 0']
    #allocation10 [shape = 'u8[4096]{0}', space=vmem, size = 0x1000, scoped, tag = 'output window, operand 1']
    #allocation11 [shape = 's32[2]{0}', space=sflag, size = 0x8, scoped, tag = 'scoped memory for tpu_custom_call.1']
    #allocation12 [shape = 'u8[4096]{0}', space=vmem, size = 0x1000, scoped, tag = 'output window, operand 2']
    #allocation13 [shape = 'u8[1024]{0}', space=vmem, size = 0x400, scoped, tag = 'output window, operand 3']
    #allocation14 [shape = 's32[2]{0}', space=sflag, size = 0x8, scoped, tag = 'scoped memory for tpu_custom_call.1']
    %16 = vsyncpa [#allocation5], 0
    %s17 = scalar_lea.sflag [#allocation5], 1
    %18 = vsyncpa %s17, 0
    %19 = vsyncpa [#allocation8], 0
    %s20 = scalar_lea.sflag [#allocation8], 1
    %21 = vsyncpa %s20, 0
    %22 = vsyncpa [#allocation6], 0
    %s23 = scalar_lea.sflag [#allocation6], 1
    %24 = vsyncpa %s23, 0
    %25 = vsyncpa [#allocation11], 0
    %s26 = scalar_lea.sflag [#allocation11], 1
    %27 = vsyncpa %s26, 0
    %28 = vsyncpa [#allocation14], 0
    %s29 = scalar_lea.sflag [#allocation14], 1
    %30 = vsyncpa %s29, 0
    loop: start=0, step=1, limit=6
    $region2: #{tpu_custom_call.1} parent=1 // loop_pre_header
      _
    $region3: #{tpu_custom_call.1} parent=1 // loop_header
      %s32 = sphi 0, %s36
      %p33 = scmp.ge.s32.totalorder %s32, 6
      %s39 = sphi 0, %s58
      %s40 = sphi 0, %s54
      %s41 = sphi 0, %s50
      %s42 = sphi 0, %s39
      %s43 = sphi 0, %s40
      %s44 = sphi 0, %s41
      %s45 = sphi 0, %s42
      %s46 = sphi 0, %s43
      %s47 = sphi 0, %s44
      %s67 = sphi 0, %s69
      %s70 = sphi 0, %s67
      %s71 = sphi 0, %s70
      %s87 = sphi 0, %s71
      %s99 = sphi 0, %s101
      %s102 = sphi 0, %s99
      %s103 = sphi 0, %s102
      %s119 = sphi 0, %s103
      %s127 = sphi 0, %s129
      %s130 = sphi 0, %s127
      %s131 = sphi 0, %s130
      %s147 = sphi 0, %s131
      %s155 = sphi 0, %s157
      %s158 = sphi 0, %s155
      %s159 = sphi 0, %s158
      %s175 = sphi 0, %s159
      %s183 = sphi 0, %s185
      %s186 = sphi 0, %s183
      %s187 = sphi 0, %s186
      %s203 = sphi 0, %s187
      %s211 = sphi 0, %s213
      %s214 = sphi 0, %s211
      %s215 = sphi 0, %s214
      %s231 = sphi 0, %s215
    $region4: #{tpu_custom_call.1} parent=1 // loop_header_branch
      %35 = sbr.rel (%p33) target = $region8
    $region5: #{tpu_custom_call.1} parent=1 // loop_body
      %s37 = ssub.s32 %s32, 1
      %s38 = ssub.s32 %s32, 2
      %s48 = sadd.s32 1, %s41
      %p49 = scmp.ge.s32.totalorder %s48, 1
      %s50 = scalar_select %p49, 0, %s48
      %s51 = sadd.s32 1, %s40
      %s52 = scalar_select %p49, %s51, %s40
      %p53 = scmp.ge.s32.totalorder %s52, 2
      %s54 = scalar_select %p53, 0, %s52
      %s55 = sadd.s32 1, %s39
      %s56 = scalar_select %p53, %s55, %s39
      %p57 = scmp.ge.s32.totalorder %s56, 2
      %s58 = scalar_select %p57, 0, %s56
      %s59 = sld [smem:[#allocation3 + %s39]]
      %s60 = sld [smem:[#allocation3 + %s58]]
      %s61 = ssub.s32 %s59, %s60
      %s62 = ssub.s32 %s40, %s54
      %s63 = sor.u32 %s61, %s62
      %s64 = ssub.s32 %s41, %s50
      %s65 = sor.u32 %s63, %s64
      %p66 = scmp.eq.s32.totalorder %s65, 0
      %s68 = sadd.s32 %s67, 1
      %s69 = scalar_select %p66, %s67, %s68
      %p72 = pneg %p66
      %p73 = scmp.eq.s32.totalorder %s32, 3
      %p74 = por %p72, %p73
      %p75 = scmp.ne.s32.totalorder %s67, %s70
      %p76 = scmp.eq.s32.totalorder %s32, 0
      %p77 = por %p75, %p76
      %p78 = scmp.ne.s32.totalorder %s67, %s70
      %p79 = scmp.eq.s32.totalorder %s37, 3
      %p80 = por %p78, %p79
      %p81 = scmp.ne.s32.totalorder %s70, %s71
      %p82 = scmp.eq.s32.totalorder %s37, 0
      %p83 = por %p81, %p82
      %p84 = scmp.ne.s32.totalorder %s70, %s71
      %p85 = scmp.eq.s32.totalorder %s38, 3
      %p86 = por %p84, %p85
      %p88 = scmp.ne.s32.totalorder %s71, %s87
      %p89 = scmp.eq.s32.totalorder %s38, 0
      %p90 = por %p88, %p89
      %s91 = sld [smem:[#allocation3 + %s39]]
      %s92 = sld [smem:[#allocation3 + %s58]]
      %s93 = ssub.s32 %s91, %s92
      %s94 = ssub.s32 %s40, %s54
      %s95 = sor.u32 %s93, %s94
      %s96 = ssub.s32 %s41, %s50
      %s97 = sor.u32 %s95, %s96
      %p98 = scmp.eq.s32.totalorder %s97, 0
      %s100 = sadd.s32 %s99, 1
      %s101 = scalar_select %p98, %s99, %s100
      %p104 = pneg %p98
      %p105 = scmp.eq.s32.totalorder %s32, 3
      %p106 = por %p104, %p105
      %p107 = scmp.ne.s32.totalorder %s99, %s102
      %p108 = scmp.eq.s32.totalorder %s32, 0
      %p109 = por %p107, %p108
      %p110 = scmp.ne.s32.totalorder %s99, %s102
      %p111 = scmp.eq.s32.totalorder %s37, 3
      %p112 = por %p110, %p111
      %p113 = scmp.ne.s32.totalorder %s102, %s103
      %p114 = scmp.eq.s32.totalorder %s37, 0
      %p115 = por %p113, %p114
      %p116 = scmp.ne.s32.totalorder %s102, %s103
      %p117 = scmp.eq.s32.totalorder %s38, 3
      %p118 = por %p116, %p117
      %p120 = scmp.ne.s32.totalorder %s103, %s119
      %p121 = scmp.eq.s32.totalorder %s38, 0
      %p122 = por %p120, %p121
      %s123 = ssub.s32 %s39, %s58
      %s124 = ssub.s32 %s40, %s54
      %s125 = sor.u32 %s123, %s124
      %p126 = scmp.eq.s32.totalorder %s125, 0
      %s128 = sadd.s32 %s127, 1
      %s129 = scalar_select %p126, %s127, %s128
      %p132 = pneg %p126
      %p133 = scmp.eq.s32.totalorder %s32, 3
      %p134 = por %p132, %p133
      %p135 = scmp.ne.s32.totalorder %s127, %s130
      %p136 = scmp.eq.s32.totalorder %s32, 0
      %p137 = por %p135, %p136
      %p138 = scmp.ne.s32.totalorder %s127, %s130
      %p139 = scmp.eq.s32.totalorder %s37, 3
      %p140 = por %p138, %p139
      %p141 = scmp.ne.s32.totalorder %s130, %s131
      %p142 = scmp.eq.s32.totalorder %s37, 0
      %p143 = por %p141, %p142
      %p144 = scmp.ne.s32.totalorder %s130, %s131
      %p145 = scmp.eq.s32.totalorder %s38, 3
      %p146 = por %p144, %p145
      %p148 = scmp.ne.s32.totalorder %s131, %s147
      %p149 = scmp.eq.s32.totalorder %s38, 0
      %p150 = por %p148, %p149
      %s151 = ssub.s32 %s39, %s58
      %s152 = ssub.s32 %s40, %s54
      %s153 = sor.u32 %s151, %s152
      %p154 = scmp.eq.s32.totalorder %s153, 0
      %s156 = sadd.s32 %s155, 1
      %s157 = scalar_select %p154, %s155, %s156
      %p160 = pneg %p154
      %p161 = scmp.eq.s32.totalorder %s32, 3
      %p162 = por %p160, %p161
      %p163 = scmp.ne.s32.totalorder %s155, %s158
      %p164 = scmp.eq.s32.totalorder %s32, 0
      %p165 = por %p163, %p164
      %p166 = scmp.ne.s32.totalorder %s155, %s158
      %p167 = scmp.eq.s32.totalorder %s37, 3
      %p168 = por %p166, %p167
      %p169 = scmp.ne.s32.totalorder %s158, %s159
      %p170 = scmp.eq.s32.totalorder %s37, 0
      %p171 = por %p169, %p170
      %p172 = scmp.ne.s32.totalorder %s158, %s159
      %p173 = scmp.eq.s32.totalorder %s38, 3
      %p174 = por %p172, %p173
      %p176 = scmp.ne.s32.totalorder %s159, %s175
      %p177 = scmp.eq.s32.totalorder %s38, 0
      %p178 = por %p176, %p177
      %s179 = ssub.s32 %s39, %s58
      %s180 = ssub.s32 %s40, %s54
      %s181 = sor.u32 %s179, %s180
      %p182 = scmp.eq.s32.totalorder %s181, 0
      %s184 = sadd.s32 %s183, 1
      %s185 = scalar_select %p182, %s183, %s184
      %p188 = pneg %p182
      %p189 = scmp.eq.s32.totalorder %s32, 3
      %p190 = por %p188, %p189
      %p191 = scmp.ne.s32.totalorder %s183, %s186
      %p192 = scmp.eq.s32.totalorder %s32, 0
      %p193 = por %p191, %p192
      %p194 = scmp.ne.s32.totalorder %s183, %s186
      %p195 = scmp.eq.s32.totalorder %s37, 3
      %p196 = por %p194, %p195
      %p197 = scmp.ne.s32.totalorder %s186, %s187
      %p198 = scmp.eq.s32.totalorder %s37, 0
      %p199 = por %p197, %p198
      %p200 = scmp.ne.s32.totalorder %s186, %s187
      %p201 = scmp.eq.s32.totalorder %s38, 3
      %p202 = por %p200, %p201
      %p204 = scmp.ne.s32.totalorder %s187, %s203
      %p205 = scmp.eq.s32.totalorder %s38, 0
      %p206 = por %p204, %p205
      %s207 = ssub.s32 %s39, %s58
      %s208 = ssub.s32 %s40, %s54
      %s209 = sor.u32 %s207, %s208
      %p210 = scmp.eq.s32.totalorder %s209, 0
      %s212 = sadd.s32 %s211, 1
      %s213 = scalar_select %p210, %s211, %s212
      %p216 = pneg %p210
      %p217 = scmp.eq.s32.totalorder %s32, 3
      %p218 = por %p216, %p217
      %p219 = scmp.ne.s32.totalorder %s211, %s214
      %p220 = scmp.eq.s32.totalorder %s32, 0
      %p221 = por %p219, %p220
      %p222 = scmp.ne.s32.totalorder %s211, %s214
      %p223 = scmp.eq.s32.totalorder %s37, 3
      %p224 = por %p222, %p223
      %p225 = scmp.ne.s32.totalorder %s214, %s215
      %p226 = scmp.eq.s32.totalorder %s37, 0
      %p227 = por %p225, %p226
      %p228 = scmp.ne.s32.totalorder %s214, %s215
      %p229 = scmp.eq.s32.totalorder %s38, 3
      %p230 = por %p228, %p229
      %p232 = scmp.ne.s32.totalorder %s215, %s231
      %p233 = scmp.eq.s32.totalorder %s38, 0
      %p234 = por %p232, %p233
      %p235 = scmp.le.s32.totalorder 1, %s32
      %p236 = scmp.lt.s32.totalorder %s32, 5
      %p237 = pnand %p235, %p236
      %p238 = pneg %p237
      // Predicated region
      $region9: #{tpu_custom_call.1} parent=5 // pred_check
        _
      $region10: #{tpu_custom_call.1} parent=5 // pred_check_branch
        %240 = sbr.rel (%p237) target = $region12
      $region11: #{tpu_custom_call.1} parent=5 // pred_region
        %s241 = ssub.s32 %s32, 1
      $region12: #{tpu_custom_call.1} parent=5 // pred_fallthru
        _
      %p242 = scmp.lt.s32.totalorder %s32, 4
      // Predicated region
      $region13: #{tpu_custom_call.1} parent=5 // pred_check
        %p243 = pneg %p242
      $region14: #{tpu_custom_call.1} parent=5 // pred_check_branch
        %245 = sbr.rel (%p243) target = $region16
      $region15: #{tpu_custom_call.1} parent=5 // pred_region
        // Predicated region
        $region17: #{tpu_custom_call.1} parent=15 // pred_check
          %p246 = pneg %p77
        $region18: #{tpu_custom_call.1} parent=15 // pred_check_branch
          %248 = sbr.rel (%p246) target = $region20
        $region19: #{tpu_custom_call.1} parent=15 // pred_region
          %s249 = sand.u32 %s67, 1
          %s250 = scalar_lea.sflag [#allocation5], %s249
          %s251 = sand.u32 %s67, 1
          %s252 = smul.addr %s251, 8
          %s253 = scalar_lea.vmem [#allocation4], %s252
          %s254 = sld [smem:[#allocation3 + %s39]]
          %s256 = ssub.s32 128, 128
          %257 = vsyncadd %s250, %s256
          %s258 = smul.addr %s40, 4
          %s259 = sadd.s32 %s41, %s258
          %s260 = smul.addr %s254, 8
          %s261 = sadd.s32 %s259, %s260
          %s262 = smul.addr %s261, 32
          %s263 = scalar_lea.hbm %s1, %s262
          %s264 = sshll.u32 %s253, 4
          %s265 = int_to_ptr.vmem [resolvable:$true] %s264
          %270 = dma.hbm_to_vmem [thread:$0]  %s263, 128, %s265, %s250, 32, 32, 2
        $region20: #{tpu_custom_call.1} parent=15 // pred_fallthru
          _
        // Predicated region
        $region21: #{tpu_custom_call.1} parent=15 // pred_check
          %p271 = pneg %p109
        $region22: #{tpu_custom_call.1} parent=15 // pred_check_branch
          %273 = sbr.rel (%p271) target = $region24
        $region23: #{tpu_custom_call.1} parent=15 // pred_region
          %s274 = sand.u32 %s99, 1
          %s275 = scalar_lea.sflag [#allocation8], %s274
          %s276 = sand.u32 %s99, 1
          %s277 = smul.addr %s276, 2
          %s278 = scalar_lea.vmem [#allocation7], %s277
          %s279 = sld [smem:[#allocation3 + %s39]]
          %s281 = ssub.s32 32, 32
          %282 = vsyncadd %s275, %s281
          %s283 = sadd.s32 %s41, %s40
          %s284 = smul.addr %s279, 2
          %s285 = sadd.s32 %s283, %s284
          %s286 = smul.addr %s285, 32
          %s287 = scalar_lea.hbm %s2, %s286
          %s289 = sshll.u32 %s278, 4
          %s290 = int_to_ptr.vmem [resolvable:$true] %s289
          %292 = dma.hbm_to_vmem [thread:$0]  %s287, 32, %s290, %s275
        $region24: #{tpu_custom_call.1} parent=15 // pred_fallthru
          _
      $region16: #{tpu_custom_call.1} parent=5 // pred_fallthru
        _
      %p293 = scmp.le.s32.totalorder 1, %s32
      %p294 = scmp.lt.s32.totalorder %s32, 5
      %p295 = pnand %p293, %p294
      %p296 = pneg %p295
      // Predicated region
      $region25: #{tpu_custom_call.1} parent=5 // pred_check
        _
      $region26: #{tpu_custom_call.1} parent=5 // pred_check_branch
        %298 = sbr.rel (%p295) target = $region28
      $region27: #{tpu_custom_call.1} parent=5 // pred_region
        %s299 = ssub.s32 %s32, 1
        %s300 = sand.u32 %s70, 1
        %s301 = scalar_lea.sflag [#allocation5], %s300
        %s302 = sand.u32 %s70, 1
        %s303 = smul.addr %s302, 8
        %s304 = scalar_lea.vmem [#allocation4], %s303
        // Predicated region
        $region29: #{tpu_custom_call.1} parent=27 // pred_check
          %p305 = pneg %p83
        $region30: #{tpu_custom_call.1} parent=27 // pred_check_branch
          %307 = sbr.rel (%p305) target = $region32
        $region31: #{tpu_custom_call.1} parent=27 // pred_region
          %308 = dma.done %s301, 128
        $region32: #{tpu_custom_call.1} parent=27 // pred_fallthru
          _
        %s309 = sand.u32 %s102, 1
        %s310 = scalar_lea.sflag [#allocation8], %s309
        %s311 = sand.u32 %s102, 1
        %s312 = smul.addr %s311, 2
        %s313 = scalar_lea.vmem [#allocation7], %s312
        // Predicated region
        $region33: #{tpu_custom_call.1} parent=27 // pred_check
          %p314 = pneg %p115
        $region34: #{tpu_custom_call.1} parent=27 // pred_check_branch
          %316 = sbr.rel (%p314) target = $region36
        $region35: #{tpu_custom_call.1} parent=27 // pred_region
          %317 = dma.done %s310, 32
        $region36: #{tpu_custom_call.1} parent=27 // pred_fallthru
          _
        %s318 = sand.u32 %s70, 1
        %s319 = scalar_lea.sflag [#allocation5], %s318
        %s320 = sand.u32 %s70, 1
        %s321 = smul.addr %s320, 8
        %s322 = scalar_lea.vmem [#allocation4], %s321
        %p323 = pneg %p83
        %p324 = pneg %p80
        %s325 = sand.u32 %s102, 1
        %s326 = scalar_lea.sflag [#allocation8], %s325
        %s327 = sand.u32 %s102, 1
        %s328 = smul.addr %s327, 2
        %s329 = scalar_lea.vmem [#allocation7], %s328
        %p330 = pneg %p115
        %p331 = pneg %p112
        %p332 = pneg %p143
        %p333 = pneg %p140
        %s334 = sand.u32 %s130, 1
        %s335 = scalar_lea.sflag [#allocation6], %s334
        %s336 = sand.u32 %s130, 1
        %s337 = smul.addr %s336, 4
        %s338 = scalar_lea.vmem [#allocation9], %s337
        %p339 = pneg %p171
        %p340 = pneg %p168
        %s341 = sand.u32 %s37, 1
        %s342 = scalar_lea.sflag [#allocation11], %s341
        %s343 = sand.u32 %s158, 1
        %s344 = smul.addr %s343, 4
        %s345 = scalar_lea.vmem [#allocation10], %s344
        %p346 = pneg %p199
        %p347 = pneg %p196
        %s348 = sand.u32 %s37, 1
        %s349 = scalar_lea.sflag [#allocation11], %s348
        %s350 = sand.u32 %s186, 1
        %s351 = smul.addr %s350, 4
        %s352 = scalar_lea.vmem [#allocation12], %s351
        %p353 = pneg %p227
        %p354 = pneg %p224
        %s355 = sand.u32 %s214, 1
        %s356 = scalar_lea.sflag [#allocation14], %s355
        %s357 = sand.u32 %s214, 1
        %s358 = scalar_lea.vmem [#allocation13], %s357
        %s359 = sld [smem:[#allocation3 + %s42]]
        %s360 = sld [smem:[#allocation3 + %s42]]
        %p361 = scmp.eq.s32.totalorder %s44, 0
        // Predicated region
        $region37: #{tpu_custom_call.1} parent=27 // pred_check
          %p362 = pneg %p361
        $region38: #{tpu_custom_call.1} parent=27 // pred_check_branch
          %364 = sbr.rel (%p362) target = $region40
        $region39: #{tpu_custom_call.1} parent=27 // pred_region
          %365 = vst [vmem:[%s338] sm:$0xf] 0.0
          %366 = vst [vmem:[%s345] sm:$0xf] 0.0
          %367 = vst [vmem:[%s352] sm:$0xf] 0.0
          %368 = vst [vmem:[%s358] sm:$0x1] 0.0
        $region40: #{tpu_custom_call.1} parent=27 // pred_fallthru
          _
        %v369 = vld [vmem:[%s304] sm:$0x3]
        %v370 = vld [vmem:[%s304 + $0x2] sm:$0x3]
        %v371 = vld [vmem:[%s304 + $0x4] sm:$0x3]
        %v372 = vld [vmem:[%s304 + $0x6] sm:$0x3]
        %v373 = vld [vmem:[%s313] sm:$0x3]
        %vm374 = vcmask 1041408
        %v375 = vsel %vm374, %v369, -inf
        %v376 = vsel %vm374, %v370, -inf
        %v377 = vsel %vm374, %v371, -inf
        %v378 = vsel %vm374, %v372, -inf
        %v379 = vmax.f32 %v375, %v376
        %v380 = vmax.f32 %v377, %v378
        %v381 = vmax.f32 %v379, %v380
        %v382 = vsub.f32 %v369, %v381
        %v383 = vsub.f32 %v370, %v381
        %v384 = vsub.f32 %v371, %v381
        %v385 = vsub.f32 %v372, %v381
        %v386 = vmul.f32 %v382, 1.442695
        %v387 = vpow.pop %v386
        %v388 = vmul.f32 %v383, 1.442695
        %v389 = vpow.pop %v388
        %v390 = vmul.f32 %v384, 1.442695
        %v391 = vpow.pop %v390
        %v392 = vmul.f32 %v385, 1.442695
        %v393 = vpow.pop %v392
        %v394 = vsel %vm374, %v387, 0.0
        %v395 = vsel %vm374, %v389, 0.0
        %v396 = vadd.f32 %v394, %v395
        %v397 = vsel %vm374, %v391, 0.0
        %v398 = vadd.f32 %v396, %v397
        %v399 = vsel %vm374, %v393, 0.0
        %v400 = vadd.f32 %v398, %v399
        %v401 = vrcp.pop %v400
        %v402 = vmul.f32 %v400, %v401
        %v403 = vsub.f32 2.0, %v402
        %v404 = vmul.f32 %v401, %v403
        %v405 = vmul.f32 %v387, %v404
        %v406 = vmul.f32 %v389, %v404
        %v407 = vmul.f32 %v391, %v404
        %v408 = vmul.f32 %v393, %v404
        %vm409 = vcmp.eq.s32.totalorder %v373, 0
        %vm410 = vcmp.eq.s32.totalorder %v373, 1
        %vm411 = vcmp.eq.s32.totalorder %v373, 2
        %vm412 = vcmp.eq.s32.totalorder %v373, 3
        %v413 = vld [vmem:[%s338] sm:$0xf]
        %v414 = vsel %vm409, %v405, 0.0
        %v415 = vsel %vm410, %v406, 0.0
        %v416 = vsel %vm411, %v407, 0.0
        %v417 = vsel %vm412, %v408, 0.0
        %v418 = vsel %vm374, %v414, 0.0
        %v419 = vrot.slane %v418, 4
        %v420 = vadd.f32 %v418, %v419
        %v421 = vrot.slane %v420, 2
        %v422 = vadd.f32 %v420, %v421
        %v423 = vrot.slane %v422, 1
        %v424 = vadd.f32 %v422, %v423
        %v425 = vsel %vm374, %v415, 0.0
        %v426 = vrot.slane %v425, 4
        %v427 = vadd.f32 %v425, %v426
        %v428 = vrot.slane %v427, 2
        %v429 = vadd.f32 %v427, %v428
        %v430 = vrot.slane %v429, 1
        %v431 = vadd.f32 %v429, %v430
        %v432 = vsel %vm374, %v416, 0.0
        %v433 = vrot.slane %v432, 4
        %v434 = vadd.f32 %v432, %v433
        %v435 = vrot.slane %v434, 2
        %v436 = vadd.f32 %v434, %v435
        %v437 = vrot.slane %v436, 1
        %v438 = vadd.f32 %v436, %v437
        %v439 = vsel %vm374, %v417, 0.0
        %v440 = vrot.slane %v439, 4
        %v441 = vadd.f32 %v439, %v440
        %v442 = vrot.slane %v441, 2
        %v443 = vadd.f32 %v441, %v442
        %v444 = vrot.slane %v443, 1
        %v445 = vadd.f32 %v443, %v444
        %vm450 = vcmask 1041409
        %v451 = vsel %vm450, %v431, %v424
        %vm452 = vcmask 1042434
        %v453 = vsel %vm452, %v438, %v451
        %vm454 = vcmask 1043459
        %v455 = vsel %vm454, %v445, %v453
        %v457 = vadd.f32 %v413, %v455
        %458 = vst [vmem:[%s338] sm:$0xf] %v457
        %v459 = vld [vmem:[%s352] sm:$0xf]
        %v460 = vsel %vm409, 1.0, 0.0
        %v461 = vsel %vm410, 1.0, 0.0
        %v462 = vsel %vm411, 1.0, 0.0
        %v463 = vsel %vm412, 1.0, 0.0
        %v464 = vsel %vm374, %v460, 0.0
        %v465 = vrot.slane %v464, 4
        %v466 = vadd.f32 %v464, %v465
        %v467 = vrot.slane %v466, 2
        %v468 = vadd.f32 %v466, %v467
        %v469 = vrot.slane %v468, 1
        %v470 = vadd.f32 %v468, %v469
        %v471 = vsel %vm374, %v461, 0.0
        %v472 = vrot.slane %v471, 4
        %v473 = vadd.f32 %v471, %v472
        %v474 = vrot.slane %v473, 2
        %v475 = vadd.f32 %v473, %v474
        %v476 = vrot.slane %v475, 1
        %v477 = vadd.f32 %v475, %v476
        %v478 = vsel %vm374, %v462, 0.0
        %v479 = vrot.slane %v478, 4
        %v480 = vadd.f32 %v478, %v479
        %v481 = vrot.slane %v480, 2
        %v482 = vadd.f32 %v480, %v481
        %v483 = vrot.slane %v482, 1
        %v484 = vadd.f32 %v482, %v483
        %v485 = vsel %vm374, %v463, 0.0
        %v486 = vrot.slane %v485, 4
        %v487 = vadd.f32 %v485, %v486
        %v488 = vrot.slane %v487, 2
        %v489 = vadd.f32 %v487, %v488
        %v490 = vrot.slane %v489, 1
        %v491 = vadd.f32 %v489, %v490
        %v496 = vsel %vm450, %v477, %v470
        %v497 = vsel %vm452, %v484, %v496
        %v498 = vsel %vm454, %v491, %v497
        %v500 = vadd.f32 %v459, %v498
        %501 = vst [vmem:[%s352] sm:$0xf] %v500
        %v502 = vld [vmem:[%s345] sm:$0xf]
        %v503 = vsel %vm374, %v405, 0.0
        %v504 = vrot.slane %v503, 4
        %v505 = vadd.f32 %v503, %v504
        %v506 = vrot.slane %v505, 2
        %v507 = vadd.f32 %v505, %v506
        %v508 = vrot.slane %v507, 1
        %v509 = vadd.f32 %v507, %v508
        %v510 = vsel %vm374, %v406, 0.0
        %v511 = vrot.slane %v510, 4
        %v512 = vadd.f32 %v510, %v511
        %v513 = vrot.slane %v512, 2
        %v514 = vadd.f32 %v512, %v513
        %v515 = vrot.slane %v514, 1
        %v516 = vadd.f32 %v514, %v515
        %v517 = vsel %vm374, %v407, 0.0
        %v518 = vrot.slane %v517, 4
        %v519 = vadd.f32 %v517, %v518
        %v520 = vrot.slane %v519, 2
        %v521 = vadd.f32 %v519, %v520
        %v522 = vrot.slane %v521, 1
        %v523 = vadd.f32 %v521, %v522
        %v524 = vsel %vm374, %v408, 0.0
        %v525 = vrot.slane %v524, 4
        %v526 = vadd.f32 %v524, %v525
        %v527 = vrot.slane %v526, 2
        %v528 = vadd.f32 %v526, %v527
        %v529 = vrot.slane %v528, 1
        %v530 = vadd.f32 %v528, %v529
        %v535 = vsel %vm450, %v516, %v509
        %v536 = vsel %vm452, %v523, %v535
        %v537 = vsel %vm454, %v530, %v536
        %v539 = vadd.f32 %v502, %v537
        %540 = vst [vmem:[%s345] sm:$0xf] %v539
        %v541 = vmax.f32 %v369, 0.0
        %v542 = vmax.f32 %v370, 0.0
        %v543 = vmax.f32 %v371, 0.0
        %v544 = vmax.f32 %v372, 0.0
        %v545 = vsel %vm409, %v369, 0.0
        %v546 = vsel %vm410, %v370, 0.0
        %v547 = vsel %vm411, %v371, 0.0
        %v548 = vsel %vm412, %v372, 0.0
        %v549 = vsub.f32 %v541, %v545
        %v550 = vsub.f32 %v542, %v546
        %v551 = vsub.f32 %v543, %v547
        %v552 = vsub.f32 %v544, %v548
        %v553 = vand.u32 2147483647, %v369
        %v554 = vand.u32 2147483647, %v370
        %v555 = vand.u32 2147483647, %v371
        %v556 = vand.u32 2147483647, %v372
        %v557 = vsub.f32 0.0, %v553
        %v558 = vsub.f32 0.0, %v554
        %v559 = vsub.f32 0.0, %v555
        %v560 = vsub.f32 0.0, %v556
        %v561 = vmul.f32 %v557, 1.442695
        %v562 = vpow.pop %v561
        %v563 = vmul.f32 %v558, 1.442695
        %v564 = vpow.pop %v563
        %v565 = vmul.f32 %v559, 1.442695
        %v566 = vpow.pop %v565
        %v567 = vmul.f32 %v560, 1.442695
        %v568 = vpow.pop %v567
        %v569 = vadd.f32 %v562, 1.0
        %v570 = vlog2.pop %v569
        %v571 = vmul.f32 %v570, 0.6931472
        %v572 = vmul.f32 -0.5, %v562
        %v573 = vadd.f32 %v572, 1.0
        %v574 = vmul.f32 %v573, %v562
        %v575 = vand.u32 2147483647, %v562
        %vm576 = vcmp.lt.f32.partialorder %v575, 0.0004427343
        %v577 = vsel %vm576, %v574, %v571
        %v578 = vadd.f32 %v564, 1.0
        %v579 = vlog2.pop %v578
        %v580 = vmul.f32 %v579, 0.6931472
        %v581 = vmul.f32 -0.5, %v564
        %v582 = vadd.f32 %v581, 1.0
        %v583 = vmul.f32 %v582, %v564
        %v584 = vand.u32 2147483647, %v564
        %vm585 = vcmp.lt.f32.partialorder %v584, 0.0004427343
        %v586 = vsel %vm585, %v583, %v580
        %v587 = vadd.f32 %v566, 1.0
        %v588 = vlog2.pop %v587
        %v589 = vmul.f32 %v588, 0.6931472
        %v590 = vmul.f32 -0.5, %v566
        %v591 = vadd.f32 %v590, 1.0
        %v592 = vmul.f32 %v591, %v566
        %v593 = vand.u32 2147483647, %v566
        %vm594 = vcmp.lt.f32.partialorder %v593, 0.0004427343
        %v595 = vsel %vm594, %v592, %v589
        %v596 = vadd.f32 %v568, 1.0
        %v597 = vlog2.pop %v596
        %v598 = vmul.f32 %v597, 0.6931472
        %v599 = vmul.f32 -0.5, %v568
        %v600 = vadd.f32 %v599, 1.0
        %v601 = vmul.f32 %v600, %v568
        %v602 = vand.u32 2147483647, %v568
        %vm603 = vcmp.lt.f32.partialorder %v602, 0.0004427343
        %v604 = vsel %vm603, %v601, %v598
        %v605 = vadd.f32 %v549, %v577
        %v606 = vadd.f32 %v550, %v586
        %v607 = vadd.f32 %v551, %v595
        %v608 = vadd.f32 %v552, %v604
        %v609 = vsel %vm374, %v605, 0.0
        %v610 = vsel %vm374, %v606, 0.0
        %v611 = vadd.f32 %v609, %v610
        %v612 = vsel %vm374, %v607, 0.0
        %v613 = vadd.f32 %v611, %v612
        %v614 = vsel %vm374, %v608, 0.0
        %v615 = vadd.f32 %v613, %v614
        %v616 = vld [vmem:[%s358] sm:$0x1]
        %v617 = vsel %vm374, %v615, 0.0
        %v618 = vrot.slane %v617, 4
        %v619 = vadd.f32 %v617, %v618
        %v620 = vrot.slane %v619, 2
        %v621 = vadd.f32 %v619, %v620
        %v622 = vrot.slane %v621, 1
        %v623 = vadd.f32 %v621, %v622
        %v624 = vadd.f32 %v616, %v623
        %625 = vst [vmem:[%s358] sm:$0x1] %v624
        %s626 = sand.u32 %s130, 1
        %s627 = scalar_lea.sflag [#allocation6], %s626
        %s628 = sand.u32 %s130, 1
        %s629 = smul.addr %s628, 4
        %s630 = scalar_lea.vmem [#allocation9], %s629
        %s631 = sand.u32 %s37, 1
        %s632 = scalar_lea.sflag [#allocation11], %s631
        %s633 = sand.u32 %s158, 1
        %s634 = smul.addr %s633, 4
        %s635 = scalar_lea.vmem [#allocation10], %s634
        %s636 = sand.u32 %s37, 1
        %s637 = scalar_lea.sflag [#allocation11], %s636
        %s638 = sand.u32 %s186, 1
        %s639 = smul.addr %s638, 4
        %s640 = scalar_lea.vmem [#allocation12], %s639
        %s641 = sand.u32 %s214, 1
        %s642 = scalar_lea.sflag [#allocation14], %s641
        %s643 = sand.u32 %s214, 1
        %s644 = scalar_lea.vmem [#allocation13], %s643
        // Predicated region
        $region41: #{tpu_custom_call.1} parent=27 // pred_check
          %p645 = pneg %p140
        $region42: #{tpu_custom_call.1} parent=27 // pred_check_branch
          %647 = sbr.rel (%p645) target = $region44
        $region43: #{tpu_custom_call.1} parent=27 // pred_region
          %s649 = ssub.s32 64, 64
          %650 = vsyncadd %s627, %s649
          %s651 = smul.addr %s42, 2
          %s652 = sadd.s32 %s43, %s651
          %s653 = smul.addr %s652, 64
          %s654 = scalar_lea.hbm %s3, %s653
          %s656 = sshll.u32 %s630, 4
          %s657 = int_to_ptr.vmem [resolvable:$true] %s656
          %659 = dma.vmem_to_hbm [thread:$0]  %s657, 64, %s654, %s627
        $region44: #{tpu_custom_call.1} parent=27 // pred_fallthru
          _
        // Predicated region
        $region45: #{tpu_custom_call.1} parent=27 // pred_check
          %p660 = pneg %p168
        $region46: #{tpu_custom_call.1} parent=27 // pred_check_branch
          %662 = sbr.rel (%p660) target = $region48
        $region47: #{tpu_custom_call.1} parent=27 // pred_region
          %s664 = ssub.s32 64, 64
          %665 = vsyncadd %s632, %s664
          %s666 = smul.addr %s42, 2
          %s667 = sadd.s32 %s43, %s666
          %s668 = smul.addr %s667, 64
          %s669 = scalar_lea.hbm %s4, %s668
          %s671 = sshll.u32 %s635, 4
          %s672 = int_to_ptr.vmem [resolvable:$true] %s671
          %674 = dma.vmem_to_hbm [thread:$0]  %s672, 64, %s669, %s632
        $region48: #{tpu_custom_call.1} parent=27 // pred_fallthru
          _
        // Predicated region
        $region49: #{tpu_custom_call.1} parent=27 // pred_check
          %p675 = pneg %p196
        $region50: #{tpu_custom_call.1} parent=27 // pred_check_branch
          %677 = sbr.rel (%p675) target = $region52
        $region51: #{tpu_custom_call.1} parent=27 // pred_region
          %s679 = ssub.s32 64, 64
          %680 = vsyncadd %s637, %s679
          %s681 = smul.addr %s42, 2
          %s682 = sadd.s32 %s43, %s681
          %s683 = smul.addr %s682, 64
          %s684 = scalar_lea.hbm %s5, %s683
          %s686 = sshll.u32 %s640, 4
          %s687 = int_to_ptr.vmem [resolvable:$true] %s686
          %689 = dma.vmem_to_hbm [thread:$0]  %s687, 64, %s684, %s637
        $region52: #{tpu_custom_call.1} parent=27 // pred_fallthru
          _
        // Predicated region
        $region53: #{tpu_custom_call.1} parent=27 // pred_check
          %p690 = pneg %p224
        $region54: #{tpu_custom_call.1} parent=27 // pred_check_branch
          %692 = sbr.rel (%p690) target = $region56
        $region55: #{tpu_custom_call.1} parent=27 // pred_region
          %s694 = ssub.s32 16, 16
          %695 = vsyncadd %s642, %s694
          %s696 = smul.addr %s42, 2
          %s697 = sadd.s32 %s43, %s696
          %s698 = smul.addr %s697, 16
          %s699 = scalar_lea.hbm %s6, %s698
          %s701 = sshll.u32 %s644, 4
          %s702 = int_to_ptr.vmem [resolvable:$true] %s701
          %704 = dma.vmem_to_hbm [thread:$0]  %s702, 16, %s699, %s642
        $region56: #{tpu_custom_call.1} parent=27 // pred_fallthru
          _
      $region28: #{tpu_custom_call.1} parent=5 // pred_fallthru
        _
      %p705 = scmp.le.s32.totalorder 2, %s32
      // Predicated region
      $region57: #{tpu_custom_call.1} parent=5 // pred_check
        %p706 = pneg %p705
      $region58: #{tpu_custom_call.1} parent=5 // pred_check_branch
        %708 = sbr.rel (%p706) target = $region60
      $region59: #{tpu_custom_call.1} parent=5 // pred_region
        %s709 = ssub.s32 %s32, 2
        // Predicated region
        $region61: #{tpu_custom_call.1} parent=59 // pred_check
          %p710 = pneg %p146
        $region62: #{tpu_custom_call.1} parent=59 // pred_check_branch
          %712 = sbr.rel (%p710) target = $region64
        $region63: #{tpu_custom_call.1} parent=59 // pred_region
          %s713 = sand.u32 %s131, 1
          %s714 = scalar_lea.sflag [#allocation6], %s713
          %s715 = sand.u32 %s131, 1
          %s716 = smul.addr %s715, 4
          %s717 = scalar_lea.vmem [#allocation9], %s716
          %718 = dma.done %s714, 64
        $region64: #{tpu_custom_call.1} parent=59 // pred_fallthru
          _
        // Predicated region
        $region65: #{tpu_custom_call.1} parent=59 // pred_check
          %p719 = pneg %p174
        $region66: #{tpu_custom_call.1} parent=59 // pred_check_branch
          %721 = sbr.rel (%p719) target = $region68
        $region67: #{tpu_custom_call.1} parent=59 // pred_region
          %s722 = sand.u32 %s38, 1
          %s723 = scalar_lea.sflag [#allocation11], %s722
          %s724 = sand.u32 %s159, 1
          %s725 = smul.addr %s724, 4
          %s726 = scalar_lea.vmem [#allocation10], %s725
          %727 = dma.done %s723, 64
        $region68: #{tpu_custom_call.1} parent=59 // pred_fallthru
          _
        // Predicated region
        $region69: #{tpu_custom_call.1} parent=59 // pred_check
          %p728 = pneg %p202
        $region70: #{tpu_custom_call.1} parent=59 // pred_check_branch
          %730 = sbr.rel (%p728) target = $region72
        $region71: #{tpu_custom_call.1} parent=59 // pred_region
          %s731 = sand.u32 %s38, 1
          %s732 = scalar_lea.sflag [#allocation11], %s731
          %s733 = sand.u32 %s187, 1
          %s734 = smul.addr %s733, 4
          %s735 = scalar_lea.vmem [#allocation12], %s734
          %736 = dma.done %s732, 64
        $region72: #{tpu_custom_call.1} parent=59 // pred_fallthru
          _
        // Predicated region
        $region73: #{tpu_custom_call.1} parent=59 // pred_check
          %p737 = pneg %p230
        $region74: #{tpu_custom_call.1} parent=59 // pred_check_branch
          %739 = sbr.rel (%p737) target = $region76
        $region75: #{tpu_custom_call.1} parent=59 // pred_region
          %s740 = sand.u32 %s215, 1
          %s741 = scalar_lea.sflag [#allocation14], %s740
          %s742 = sand.u32 %s215, 1
          %s743 = scalar_lea.vmem [#allocation13], %s742
          %744 = dma.done %s741, 16
        $region76: #{tpu_custom_call.1} parent=59 // pred_fallthru
          _
      $region60: #{tpu_custom_call.1} parent=5 // pred_fallthru
        _
    $region6: #{tpu_custom_call.1} parent=1 // loop_footer
      %s36 = sadd.s32 1, %s32
    $region7: #{tpu_custom_call.1} parent=1 // loop_footer_branch
      %31 = sbr.rel target = $region3
    $region8: #{tpu_custom_call.1} parent=1 // loop_exit
      _
    %745 = vsyncpa [#allocation5], 1
    %s746 = scalar_lea.sflag [#allocation5], 1
    %747 = vsyncpa %s746, 1
    %748 = vsyncpa [#allocation8], 1
    %s749 = scalar_lea.sflag [#allocation8], 1
    %750 = vsyncpa %s749, 1
    %751 = vsyncpa [#allocation6], 1
    %s752 = scalar_lea.sflag [#allocation6], 1
    %753 = vsyncpa %s752, 1
    %754 = vsyncpa [#allocation11], 1
    %s755 = scalar_lea.sflag [#allocation11], 1
    %756 = vsyncpa %s755, 1
    %757 = vsyncpa [#allocation14], 1
    %s758 = scalar_lea.sflag [#allocation14], 1
    %759 = vsyncpa %s758, 1

</llo_original>
